<compile_context>
chip_gen: v7x
topology: tpu7x:2x2x1
jax: 0.10.0
libtpu: 0.0.40
codegen_flags: <defaults>
</compile_context>

<pallas_src>
import functools

import jax
import jax.numpy as jnp
from jax.experimental import pallas as pl
from jax.experimental.pallas import tpu as pltpu


def _round_up(x, m):
    return ((x + m - 1) // m) * m


def _reward_kernel(state_ref, action_ref,
                   w1s_ref, w1a_ref, b1_ref,
                   w2_ref, b2_ref,
                   w3_ref, b3_ref,
                   out_ref):
    # Trunk layer 1 (action-embedding linear algebraically folded in):
    #   h1 = relu(state @ W1_state + action @ W_act_fused + b1_fused)
    h1 = (jnp.dot(state_ref[...], w1s_ref[...], preferred_element_type=jnp.float32)
          + jnp.dot(action_ref[...], w1a_ref[...], preferred_element_type=jnp.float32)
          + b1_ref[...])
    h1 = jnp.maximum(h1, 0.0).astype(jnp.bfloat16)

    # Trunk layer 2 + ReLU (bf16 inputs, f32 accumulate).
    h2 = jnp.dot(h1, w2_ref[...], preferred_element_type=jnp.float32) + b2_ref[...]
    h2 = jnp.maximum(h2, 0.0)

    # Head 128 -> 1: VPU multiply + lane reduction instead of an N=1 MXU pass,
    # stored lane-dense as a (1, TB) tile (batch on lanes).
    red = jnp.sum(h2 * w3_ref[...], axis=1)          # (TB,)
    out_ref[...] = red[None, :] + b3_ref[0, 0]


@functools.partial(jax.jit, static_argnames=("block_b",))
def reward_model_forward(state, action, fused_params, *, block_b=1024):
    """Full RewardModel forward in one pallas_call over a batch grid."""
    B, R = state.shape
    A = action.shape[1]
    H = fused_params["w2"].shape[0]                  # hidden = 128

    # Batch tile: multiple of 128 (lane-dense output), capped by block_b.
    tb = _round_up(min(block_b, B), 128)
    bp = _round_up(B, tb)
    if bp != B:
        state = jnp.pad(state, ((0, bp - B), (0, 0)))
        action = jnp.pad(action, ((0, bp - B), (0, 0)))

    # bf16 activations halve the streaming HBM bytes; MXU accumulates in f32.
    state = state.astype(jnp.bfloat16)
    action = action.astype(jnp.bfloat16)

    grid = (bp // tb,)

    # Advisory cost estimate for XLA scheduling around the custom call.
    flops = 2 * bp * (R * H + A * H + H * H + H)
    bytes_accessed = (bp * (R + A) * 2 + bp * 4                      # acts in/out
                      + (R * H + A * H + H * H) * 2                  # bf16 weights
                      + (H + H + H + 1) * 4)                         # f32 biases + w3
    cost = pl.CostEstimate(flops=flops, transcendentals=0,
                           bytes_accessed=bytes_accessed)

    batch_tile = lambda feat: pl.BlockSpec((tb, feat), lambda i: (i, 0))
    resident = lambda shape: pl.BlockSpec(shape, lambda i: (0, 0))   # weights stay put

    out = pl.pallas_call(
        _reward_kernel,
        out_shape=jax.ShapeDtypeStruct((1, bp), jnp.float32),
        grid=grid,
        in_specs=[
            batch_tile(R),                                   # state    (tb, R)
            batch_tile(A),                                   # action   (tb, A)
            resident((R, H)),                                # W1_state
            resident((A, H)),                                # W_act_fused
            resident((1, H)),                                # b1_fused
            resident((H, H)),                                # W2
            resident((1, H)),                                # b2
            resident((1, H)),                                # w3 as a (1, H) row
            pl.BlockSpec(memory_space=pltpu.MemorySpace.SMEM),   # b3 scalar
        ],
        out_specs=pl.BlockSpec((1, tb), lambda i: (0, i)),   # lane-dense output
        compiler_params=pltpu.CompilerParams(
            dimension_semantics=("parallel",)),
        cost_estimate=cost,
    )(state, action,
      fused_params["w1_state"], fused_params["w_act_fused"], fused_params["b1_fused"],
      fused_params["w2"], fused_params["b2"],
      fused_params["w3_row"], fused_params["b3"])

    # (1, bp) row-major == (bp, 1) row-major; cheap reshape + crop padding.
    return out.reshape(bp, 1)[:B]


def init_params(key, representation_size, action_shape):
    """PyTorch-style uniform fan-in init; weights stored (in, out) so y = x @ W + b."""
    def linear(key, fan_in, fan_out):
        kw, kb = jax.random.split(key)
        bound = 1.0 / jnp.sqrt(fan_in)
        w = jax.random.uniform(kw, (fan_in, fan_out), jnp.float32, -bound, bound)
        b = jax.random.uniform(kb, (1, fan_out), jnp.float32, -bound, bound)
        return w, b

    k_act, k1, k2, k3 = jax.random.split(key, 4)
    w_act, b_act = linear(k_act, action_shape, representation_size)
    w1, b1 = linear(k1, representation_size * 2, 128)
    w2, b2 = linear(k2, 128, 128)
    w3, b3 = linear(k3, 128, 1)
    return {"w_act": w_act, "b_act": b_act, "w1": w1, "b1": b1,
            "w2": w2, "b2": b2, "w3": w3, "b3": b3}


def fuse_params(params, representation_size):
    """Offline, exact fold of the action-embedding linear into trunk layer 1;
    cast weights to bf16 (f32 accumulation in-kernel), keep biases in f32."""
    R = representation_size
    w1_state = params["w1"][:R, :]
    w1_act = params["w1"][R:, :]
    w_act_fused = params["w_act"] @ w1_act                     # (A, 128)
    b1_fused = params["b_act"] @ w1_act + params["b1"]         # (1, 128)
    return {
        "w1_state": w1_state.astype(jnp.bfloat16),
        "w_act_fused": w_act_fused.astype(jnp.bfloat16),
        "b1_fused": b1_fused.astype(jnp.float32),
        "w2": params["w2"].astype(jnp.bfloat16),
        "b2": params["b2"].astype(jnp.float32),
        "w3_row": params["w3"].T.astype(jnp.float32),          # (1, 128), used on VPU
        "b3": params["b3"].astype(jnp.float32),                # (1, 1) -> SMEM
    }


def reward_model_reference(state, action, params):
    """Plain-JAX f32 reference mirroring the PyTorch forward exactly."""
    emb = action @ params["w_act"] + params["b_act"]
    x = jnp.concatenate([state, emb], axis=-1)
    h = jnp.maximum(x @ params["w1"] + params["b1"], 0.0)
    h = jnp.maximum(h @ params["w2"] + params["b2"], 0.0)
    return h @ params["w3"] + params["b3"]


if __name__ == "__main__":
    representation_size = 32
    action_shape = 8
    batch = 512          # small, but enough rows to exercise the batch grid

    key = jax.random.PRNGKey(0)
    k_state, k_action, k_params = jax.random.split(key, 3)

    state = jax.random.normal(k_state, (batch, representation_size), jnp.float32)
    action = jax.random.normal(k_action, (batch, action_shape), jnp.float32)

    params = init_params(k_params, representation_size, action_shape)
    fused = fuse_params(params, representation_size)

    # block_b=128 -> grid of 4 batch tiles (pipelining + weight residency exercised).
    out = reward_model_forward(state, action, fused, block_b=128)
    out = jax.block_until_ready(out)

    ref = reward_model_reference(state, action, params)
    assert out.shape == (batch, 1), out.shape
    max_err = float(jnp.max(jnp.abs(out - ref)))
    # bf16 weights/activations with f32 accumulation vs pure-f32 reference.
    assert jnp.allclose(out, ref, atol=2e-2, rtol=2e-2), f"max abs err {max_err}"

    print("KERNEL_OK")
</pallas_src>

<mosaic_0001>
module attributes {stable_mosaic.version = 11 : i64} {
  func.func @_reward_kernel(%arg0: i32, %arg1: memref<128x32xbf16, #tpu.memory_space<vmem>>, %arg2: memref<128x8xbf16, #tpu.memory_space<vmem>>, %arg3: memref<32x128xbf16, #tpu.memory_space<vmem>>, %arg4: memref<8x128xbf16, #tpu.memory_space<vmem>>, %arg5: memref<1x128xf32, #tpu.memory_space<vmem>>, %arg6: memref<128x128xbf16, #tpu.memory_space<vmem>>, %arg7: memref<1x128xf32, #tpu.memory_space<vmem>>, %arg8: memref<1x128xf32, #tpu.memory_space<vmem>>, %arg9: memref<1x1xf32, #tpu.memory_space<smem>>, %arg10: memref<1x128xf32, #tpu.memory_space<vmem>>) attributes {dimension_semantics = [#tpu.dimension_semantics<parallel>], iteration_bounds = array<i64: 4>, scalar_prefetch = 0 : i64, scratch_operands = 0 : i64, tpu.core_type = #tpu.core_type<tc>, window_params = [{transform_indices = @transform_0, window_bounds = array<i64: 128, 32>}, {transform_indices = @transform_1, window_bounds = array<i64: 128, 8>}, {pipeline_mode = #tpu.pipeline_mode<synchronous>, transform_indices = @transform_2, window_bounds = array<i64: 32, 128>}, {pipeline_mode = #tpu.pipeline_mode<synchronous>, transform_indices = @transform_3, window_bounds = array<i64: 8, 128>}, {pipeline_mode = #tpu.pipeline_mode<synchronous>, transform_indices = @transform_4, window_bounds = array<i64: 1, 128>}, {pipeline_mode = #tpu.pipeline_mode<synchronous>, transform_indices = @transform_5, window_bounds = array<i64: 128, 128>}, {pipeline_mode = #tpu.pipeline_mode<synchronous>, transform_indices = @transform_6, window_bounds = array<i64: 1, 128>}, {pipeline_mode = #tpu.pipeline_mode<synchronous>, transform_indices = @transform_7, window_bounds = array<i64: 1, 128>}, {transform_indices = @transform_8, window_bounds = array<i64: 1, 1>}, {transform_indices = @transform_9, window_bounds = array<i64: 1, 128>}]} {
    %c0 = arith.constant 0 : index
    %c0_0 = arith.constant 0 : index
    %0 = vector.load %arg1[%c0, %c0_0] : memref<128x32xbf16, #tpu.memory_space<vmem>>, vector<128x32xbf16>
    %c0_1 = arith.constant 0 : index
    %c0_2 = arith.constant 0 : index
    %1 = vector.load %arg3[%c0_1, %c0_2] : memref<32x128xbf16, #tpu.memory_space<vmem>>, vector<32x128xbf16>
    %cst = arith.constant dense<0.000000e+00> : vector<128x128xf32>
    %2 = tpu.matmul %0, %1, %cst {dimension_numbers = #tpu.dot_dimension_numbers<[1], [0], [0], [1], [0, 0, 1, 1], [], []>} : vector<128x32xbf16>, vector<32x128xbf16>, vector<128x128xf32> -> vector<128x128xf32>
    %c0_3 = arith.constant 0 : index
    %c0_4 = arith.constant 0 : index
    %3 = vector.load %arg2[%c0_3, %c0_4] : memref<128x8xbf16, #tpu.memory_space<vmem>>, vector<128x8xbf16>
    %c0_5 = arith.constant 0 : index
    %c0_6 = arith.constant 0 : index
    %4 = vector.load %arg4[%c0_5, %c0_6] : memref<8x128xbf16, #tpu.memory_space<vmem>>, vector<8x128xbf16>
    %cst_7 = arith.constant dense<0.000000e+00> : vector<128x128xf32>
    %5 = tpu.matmul %3, %4, %cst_7 {dimension_numbers = #tpu.dot_dimension_numbers<[1], [0], [0], [1], [0, 0, 1, 1], [], []>} : vector<128x8xbf16>, vector<8x128xbf16>, vector<128x128xf32> -> vector<128x128xf32>
    %6 = arith.addf %2, %5 : vector<128x128xf32>
    %c0_8 = arith.constant 0 : index
    %c0_9 = arith.constant 0 : index
    %7 = vector.load %arg5[%c0_8, %c0_9] : memref<1x128xf32, #tpu.memory_space<vmem>>, vector<1x128xf32>
    %8 = vector.broadcast %7 : vector<1x128xf32> to vector<128x128xf32>
    %9 = arith.addf %6, %8 : vector<128x128xf32>
    %cst_10 = arith.constant 0.000000e+00 : f32
    %10 = vector.broadcast %cst_10 : f32 to vector<128x128xf32>
    %11 = arith.maximumf %9, %10 : vector<128x128xf32>
    %12 = arith.truncf %11 : vector<128x128xf32> to vector<128x128xbf16>
    %c0_11 = arith.constant 0 : index
    %c0_12 = arith.constant 0 : index
    %13 = vector.load %arg6[%c0_11, %c0_12] : memref<128x128xbf16, #tpu.memory_space<vmem>>, vector<128x128xbf16>
    %cst_13 = arith.constant dense<0.000000e+00> : vector<128x128xf32>
    %14 = tpu.matmul %12, %13, %cst_13 {dimension_numbers = #tpu.dot_dimension_numbers<[1], [0], [0], [1], [0, 0, 1, 1], [], []>} : vector<128x128xbf16>, vector<128x128xbf16>, vector<128x128xf32> -> vector<128x128xf32>
    %c0_14 = arith.constant 0 : index
    %c0_15 = arith.constant 0 : index
    %15 = vector.load %arg7[%c0_14, %c0_15] : memref<1x128xf32, #tpu.memory_space<vmem>>, vector<1x128xf32>
    %16 = vector.broadcast %15 : vector<1x128xf32> to vector<128x128xf32>
    %17 = arith.addf %14, %16 : vector<128x128xf32>
    %cst_16 = arith.constant 0.000000e+00 : f32
    %18 = vector.broadcast %cst_16 : f32 to vector<128x128xf32>
    %19 = arith.maximumf %17, %18 : vector<128x128xf32>
    %c0_17 = arith.constant 0 : index
    %c0_18 = arith.constant 0 : index
    %20 = vector.load %arg8[%c0_17, %c0_18] : memref<1x128xf32, #tpu.memory_space<vmem>>, vector<1x128xf32>
    %21 = vector.broadcast %20 : vector<1x128xf32> to vector<128x128xf32>
    %22 = arith.mulf %19, %21 : vector<128x128xf32>
    %cst_19 = arith.constant dense<0.000000e+00> : vector<128xf32>
    %23 = vector.multi_reduction <add>, %22, %cst_19 [1] : vector<128x128xf32> to vector<128xf32>
    %24 = vector.shape_cast %23 : vector<128xf32> to vector<1x128xf32>
    %c0_20 = arith.constant 0 : index
    %c0_21 = arith.constant 0 : index
    %25 = memref.load %arg9[%c0_20, %c0_21] : memref<1x1xf32, #tpu.memory_space<smem>>
    %26 = vector.broadcast %25 : f32 to vector<1x128xf32>
    %27 = arith.addf %24, %26 : vector<1x128xf32>
    %c0_22 = arith.constant 0 : index
    %c0_23 = arith.constant 0 : index
    %28 = vector.load %arg10[%c0_22, %c0_23] : memref<1x128xf32, #tpu.memory_space<vmem>>, vector<1x128xf32>
    tpu.vector_store %arg10[%c0_22, %c0_23], %27 {strides = array<i32>} : memref<1x128xf32, #tpu.memory_space<vmem>>, vector<1x128xf32>,
    return
  }
  func.func @transform_0(%arg0: i32) -> (i32, i32) {
    %c0_i32 = arith.constant 0 : i32
    %c0_i32_0 = arith.constant 0 : i32
    return %arg0, %c0_i32 : i32, i32
  }
  func.func @transform_1(%arg0: i32) -> (i32, i32) {
    %c0_i32 = arith.constant 0 : i32
    %c0_i32_0 = arith.constant 0 : i32
    return %arg0, %c0_i32 : i32, i32
  }
  func.func @transform_2(%arg0: i32) -> (i32, i32) {
    %c0_i32 = arith.constant 0 : i32
    %c0_i32_0 = arith.constant 0 : i32
    %c0_i32_1 = arith.constant 0 : i32
    return %c0_i32, %c0_i32_0 : i32, i32
  }
  func.func @transform_3(%arg0: i32) -> (i32, i32) {
    %c0_i32 = arith.constant 0 : i32
    %c0_i32_0 = arith.constant 0 : i32
    %c0_i32_1 = arith.constant 0 : i32
    return %c0_i32, %c0_i32_0 : i32, i32
  }
  func.func @transform_4(%arg0: i32) -> (i32, i32) {
    %c0_i32 = arith.constant 0 : i32
    %c0_i32_0 = arith.constant 0 : i32
    %c0_i32_1 = arith.constant 0 : i32
    return %c0_i32, %c0_i32_0 : i32, i32
  }
  func.func @transform_5(%arg0: i32) -> (i32, i32) {
    %c0_i32 = arith.constant 0 : i32
    %c0_i32_0 = arith.constant 0 : i32
    %c0_i32_1 = arith.constant 0 : i32
    return %c0_i32, %c0_i32_0 : i32, i32
  }
  func.func @transform_6(%arg0: i32) -> (i32, i32) {
    %c0_i32 = arith.constant 0 : i32
    %c0_i32_0 = arith.constant 0 : i32
    %c0_i32_1 = arith.constant 0 : i32
    return %c0_i32, %c0_i32_0 : i32, i32
  }
  func.func @transform_7(%arg0: i32) -> (i32, i32) {
    %c0_i32 = arith.constant 0 : i32
    %c0_i32_0 = arith.constant 0 : i32
    %c0_i32_1 = arith.constant 0 : i32
    return %c0_i32, %c0_i32_0 : i32, i32
  }
  func.func @transform_8(%arg0: i32) -> (i32, i32) {
    %c0_i32 = arith.constant 0 : i32
    %c0_i32_0 = arith.constant 0 : i32
    %c0_i32_1 = arith.constant 0 : i32
    return %c0_i32, %c0_i32_0 : i32, i32
  }
  func.func @transform_9(%arg0: i32) -> (i32, i32) {
    %c0_i32 = arith.constant 0 : i32
    %c0_i32_0 = arith.constant 0 : i32
    return %c0_i32, %arg0 : i32, i32
  }
}

</mosaic_0001>

<llo_original>
// kernel: reward_model_forward.1
$region0: #{reward_model_forward.1}
  #allocation0 [shape = 'u32[]', space=smem, size = 0x4, offset = 0x4, fixed_abs, tag = 'smem constant byte address 0x4 - core index']
  #allocation1 [shape = 'u32[144,128]{1,0:T(1,128)}', space=vmem, size = 0x12000, scoped, tag = 'internal scratch']
  #allocation2 [shape = 'f32[1,1]{1,0:T(1,128)S(6)}', space=smem, size = 0x200, scoped, tag = 'scoped memory for reward_model_forward.1']
  %s0 = inlined_call_operand.vmem [shape: bf16[512,32], index: 0, kind: input, shape index: {}]
  %s1 = inlined_call_operand.vmem [shape: bf16[512,8], index: 1, kind: input, shape index: {}]
  %s2 = inlined_call_operand.vmem [shape: bf16[32,128], index: 2, kind: input, shape index: {}]
  %s3 = inlined_call_operand.vmem [shape: bf16[8,128], index: 3, kind: input, shape index: {}]
  %s4 = inlined_call_operand.vmem [shape: f32[1,128], index: 4, kind: input, shape index: {}]
  %s5 = inlined_call_operand.vmem [shape: bf16[128,128], index: 5, kind: input, shape index: {}]
  %s6 = inlined_call_operand.vmem [shape: f32[1,128], index: 6, kind: input, shape index: {}]
  %s7 = inlined_call_operand.vmem [shape: f32[1,128], index: 7, kind: input, shape index: {}]
  %s8 = inlined_call_operand.<no memory space> [shape: f32[1,1], index: 8, kind: input, shape index: {}]
  %s9 = inlined_call_operand.hbm [shape: f32[1,512], index: 9, kind: output, shape index: {}]
  %s10 = sld [smem:[#allocation0]]
  $region69: #{reward_model_forward.1} parent=0
    _
  %s12 = ssub.s32 1, %s10
  %s13 = scalar_select 0, %s12, %s10
  %14 = sst [smem:[#allocation2]] %s8
  $region1: #{reward_model_forward.1} parent=0
    #allocation3 [shape = 'u8[1024]{0}', space=vmem, size = 0x400, scoped, tag = 'output window, operand 0']
    #allocation4 [shape = 's32[2]{0}', space=sflag, size = 0x8, scoped, tag = 'scoped memory for reward_model_forward.1']
    %15 = vsyncpa [#allocation4], 0
    %s16 = scalar_lea.sflag [#allocation4], 1
    %17 = vsyncpa %s16, 0
    loop: start=0, step=1, limit=6
    $region2: #{reward_model_forward.1} parent=1 // loop_pre_header
      _
    $region3: #{reward_model_forward.1} parent=1 // loop_header
      %s19 = sphi 0, %s23
      %p20 = scmp.ge.s32.totalorder %s19, 6
      %s29 = sphi 0, %s31
      %s32 = sphi 0, %s29
      %s33 = sphi 0, %s32
      %s49 = sphi 0, %s33
      %s55 = sphi 0, %s57
      %s58 = sphi 0, %s55
      %s59 = sphi 0, %s58
      %s75 = sphi 0, %s59
      %s79 = sphi 0, %s79
      %s81 = sphi 0, %s79
      %s82 = sphi 0, %s81
      %s96 = sphi 0, %s82
      %s100 = sphi 0, %s100
      %s102 = sphi 0, %s100
      %s103 = sphi 0, %s102
      %s117 = sphi 0, %s103
      %s121 = sphi 0, %s121
      %s123 = sphi 0, %s121
      %s124 = sphi 0, %s123
      %s138 = sphi 0, %s124
      %s142 = sphi 0, %s142
      %s144 = sphi 0, %s142
      %s145 = sphi 0, %s144
      %s159 = sphi 0, %s145
      %s163 = sphi 0, %s163
      %s165 = sphi 0, %s163
      %s166 = sphi 0, %s165
      %s180 = sphi 0, %s166
      %s184 = sphi 0, %s184
      %s186 = sphi 0, %s184
      %s187 = sphi 0, %s186
      %s201 = sphi 0, %s187
      %s205 = sphi 0, %s205
      %s207 = sphi 0, %s205
      %s208 = sphi 0, %s207
      %s222 = sphi 0, %s208
      %s228 = sphi 0, %s230
      %s231 = sphi 0, %s228
      %s232 = sphi 0, %s231
      %s248 = sphi 0, %s232
    $region4: #{reward_model_forward.1} parent=1 // loop_header_branch
      %22 = sbr.rel (%p20) target = $region8
    $region5: #{reward_model_forward.1} parent=1 // loop_body
      %s24 = ssub.s32 %s19, 1
      %s25 = ssub.s32 %s19, 2
      %s26 = sadd.s32 %s19, 1
      %s27 = ssub.s32 %s19, %s26
      %p28 = scmp.eq.s32.totalorder %s27, 0
      %s30 = sadd.s32 %s29, 1
      %s31 = scalar_select %p28, %s29, %s30
      %p34 = pneg %p28
      %p35 = scmp.eq.s32.totalorder %s19, 3
      %p36 = por %p34, %p35
      %p37 = scmp.ne.s32.totalorder %s29, %s32
      %p38 = scmp.eq.s32.totalorder %s19, 0
      %p39 = por %p37, %p38
      %p40 = scmp.ne.s32.totalorder %s29, %s32
      %p41 = scmp.eq.s32.totalorder %s24, 3
      %p42 = por %p40, %p41
      %p43 = scmp.ne.s32.totalorder %s32, %s33
      %p44 = scmp.eq.s32.totalorder %s24, 0
      %p45 = por %p43, %p44
      %p46 = scmp.ne.s32.totalorder %s32, %s33
      %p47 = scmp.eq.s32.totalorder %s25, 3
      %p48 = por %p46, %p47
      %p50 = scmp.ne.s32.totalorder %s33, %s49
      %p51 = scmp.eq.s32.totalorder %s25, 0
      %p52 = por %p50, %p51
      %s53 = ssub.s32 %s19, %s26
      %p54 = scmp.eq.s32.totalorder %s53, 0
      %s56 = sadd.s32 %s55, 1
      %s57 = scalar_select %p54, %s55, %s56
      %p60 = pneg %p54
      %p61 = scmp.eq.s32.totalorder %s19, 3
      %p62 = por %p60, %p61
      %p63 = scmp.ne.s32.totalorder %s55, %s58
      %p64 = scmp.eq.s32.totalorder %s19, 0
      %p65 = por %p63, %p64
      %p66 = scmp.ne.s32.totalorder %s55, %s58
      %p67 = scmp.eq.s32.totalorder %s24, 3
      %p68 = por %p66, %p67
      %p69 = scmp.ne.s32.totalorder %s58, %s59
      %p70 = scmp.eq.s32.totalorder %s24, 0
      %p71 = por %p69, %p70
      %p72 = scmp.ne.s32.totalorder %s58, %s59
      %p73 = scmp.eq.s32.totalorder %s25, 3
      %p74 = por %p72, %p73
      %p76 = scmp.ne.s32.totalorder %s59, %s75
      %p77 = scmp.eq.s32.totalorder %s25, 0
      %p78 = por %p76, %p77
      %s80 = sadd.s32 %s79, 1
      %p83 = scmp.eq.s32.totalorder %s19, 3
      %p84 = scmp.ne.s32.totalorder %s79, %s81
      %p85 = scmp.eq.s32.totalorder %s19, 0
      %p86 = por %p84, %p85
      %p87 = scmp.ne.s32.totalorder %s79, %s81
      %p88 = scmp.eq.s32.totalorder %s24, 3
      %p89 = por %p87, %p88
      %p90 = scmp.ne.s32.totalorder %s81, %s82
      %p91 = scmp.eq.s32.totalorder %s24, 0
      %p92 = por %p90, %p91
      %p93 = scmp.ne.s32.totalorder %s81, %s82
      %p94 = scmp.eq.s32.totalorder %s25, 3
      %p95 = por %p93, %p94
      %p97 = scmp.ne.s32.totalorder %s82, %s96
      %p98 = scmp.eq.s32.totalorder %s25, 0
      %p99 = por %p97, %p98
      %s101 = sadd.s32 %s100, 1
      %p104 = scmp.eq.s32.totalorder %s19, 3
      %p105 = scmp.ne.s32.totalorder %s100, %s102
      %p106 = scmp.eq.s32.totalorder %s19, 0
      %p107 = por %p105, %p106
      %p108 = scmp.ne.s32.totalorder %s100, %s102
      %p109 = scmp.eq.s32.totalorder %s24, 3
      %p110 = por %p108, %p109
      %p111 = scmp.ne.s32.totalorder %s102, %s103
      %p112 = scmp.eq.s32.totalorder %s24, 0
      %p113 = por %p111, %p112
      %p114 = scmp.ne.s32.totalorder %s102, %s103
      %p115 = scmp.eq.s32.totalorder %s25, 3
      %p116 = por %p114, %p115
      %p118 = scmp.ne.s32.totalorder %s103, %s117
      %p119 = scmp.eq.s32.totalorder %s25, 0
      %p120 = por %p118, %p119
      %s122 = sadd.s32 %s121, 1
      %p125 = scmp.eq.s32.totalorder %s19, 3
      %p126 = scmp.ne.s32.totalorder %s121, %s123
      %p127 = scmp.eq.s32.totalorder %s19, 0
      %p128 = por %p126, %p127
      %p129 = scmp.ne.s32.totalorder %s121, %s123
      %p130 = scmp.eq.s32.totalorder %s24, 3
      %p131 = por %p129, %p130
      %p132 = scmp.ne.s32.totalorder %s123, %s124
      %p133 = scmp.eq.s32.totalorder %s24, 0
      %p134 = por %p132, %p133
      %p135 = scmp.ne.s32.totalorder %s123, %s124
      %p136 = scmp.eq.s32.totalorder %s25, 3
      %p137 = por %p135, %p136
      %p139 = scmp.ne.s32.totalorder %s124, %s138
      %p140 = scmp.eq.s32.totalorder %s25, 0
      %p141 = por %p139, %p140
      %s143 = sadd.s32 %s142, 1
      %p146 = scmp.eq.s32.totalorder %s19, 3
      %p147 = scmp.ne.s32.totalorder %s142, %s144
      %p148 = scmp.eq.s32.totalorder %s19, 0
      %p149 = por %p147, %p148
      %p150 = scmp.ne.s32.totalorder %s142, %s144
      %p151 = scmp.eq.s32.totalorder %s24, 3
      %p152 = por %p150, %p151
      %p153 = scmp.ne.s32.totalorder %s144, %s145
      %p154 = scmp.eq.s32.totalorder %s24, 0
      %p155 = por %p153, %p154
      %p156 = scmp.ne.s32.totalorder %s144, %s145
      %p157 = scmp.eq.s32.totalorder %s25, 3
      %p158 = por %p156, %p157
      %p160 = scmp.ne.s32.totalorder %s145, %s159
      %p161 = scmp.eq.s32.totalorder %s25, 0
      %p162 = por %p160, %p161
      %s164 = sadd.s32 %s163, 1
      %p167 = scmp.eq.s32.totalorder %s19, 3
      %p168 = scmp.ne.s32.totalorder %s163, %s165
      %p169 = scmp.eq.s32.totalorder %s19, 0
      %p170 = por %p168, %p169
      %p171 = scmp.ne.s32.totalorder %s163, %s165
      %p172 = scmp.eq.s32.totalorder %s24, 3
      %p173 = por %p171, %p172
      %p174 = scmp.ne.s32.totalorder %s165, %s166
      %p175 = scmp.eq.s32.totalorder %s24, 0
      %p176 = por %p174, %p175
      %p177 = scmp.ne.s32.totalorder %s165, %s166
      %p178 = scmp.eq.s32.totalorder %s25, 3
      %p179 = por %p177, %p178
      %p181 = scmp.ne.s32.totalorder %s166, %s180
      %p182 = scmp.eq.s32.totalorder %s25, 0
      %p183 = por %p181, %p182
      %s185 = sadd.s32 %s184, 1
      %p188 = scmp.eq.s32.totalorder %s19, 3
      %p189 = scmp.ne.s32.totalorder %s184, %s186
      %p190 = scmp.eq.s32.totalorder %s19, 0
      %p191 = por %p189, %p190
      %p192 = scmp.ne.s32.totalorder %s184, %s186
      %p193 = scmp.eq.s32.totalorder %s24, 3
      %p194 = por %p192, %p193
      %p195 = scmp.ne.s32.totalorder %s186, %s187
      %p196 = scmp.eq.s32.totalorder %s24, 0
      %p197 = por %p195, %p196
      %p198 = scmp.ne.s32.totalorder %s186, %s187
      %p199 = scmp.eq.s32.totalorder %s25, 3
      %p200 = por %p198, %p199
      %p202 = scmp.ne.s32.totalorder %s187, %s201
      %p203 = scmp.eq.s32.totalorder %s25, 0
      %p204 = por %p202, %p203
      %s206 = sadd.s32 %s205, 1
      %p209 = scmp.eq.s32.totalorder %s19, 3
      %p210 = scmp.ne.s32.totalorder %s205, %s207
      %p211 = scmp.eq.s32.totalorder %s19, 0
      %p212 = por %p210, %p211
      %p213 = scmp.ne.s32.totalorder %s205, %s207
      %p214 = scmp.eq.s32.totalorder %s24, 3
      %p215 = por %p213, %p214
      %p216 = scmp.ne.s32.totalorder %s207, %s208
      %p217 = scmp.eq.s32.totalorder %s24, 0
      %p218 = por %p216, %p217
      %p219 = scmp.ne.s32.totalorder %s207, %s208
      %p220 = scmp.eq.s32.totalorder %s25, 3
      %p221 = por %p219, %p220
      %p223 = scmp.ne.s32.totalorder %s208, %s222
      %p224 = scmp.eq.s32.totalorder %s25, 0
      %p225 = por %p223, %p224
      %s226 = ssub.s32 %s19, %s26
      %p227 = scmp.eq.s32.totalorder %s226, 0
      %s229 = sadd.s32 %s228, 1
      %s230 = scalar_select %p227, %s228, %s229
      %p233 = pneg %p227
      %p234 = scmp.eq.s32.totalorder %s19, 3
      %p235 = por %p233, %p234
      %p236 = scmp.ne.s32.totalorder %s228, %s231
      %p237 = scmp.eq.s32.totalorder %s19, 0
      %p238 = por %p236, %p237
      %p239 = scmp.ne.s32.totalorder %s228, %s231
      %p240 = scmp.eq.s32.totalorder %s24, 3
      %p241 = por %p239, %p240
      %p242 = scmp.ne.s32.totalorder %s231, %s232
      %p243 = scmp.eq.s32.totalorder %s24, 0
      %p244 = por %p242, %p243
      %p245 = scmp.ne.s32.totalorder %s231, %s232
      %p246 = scmp.eq.s32.totalorder %s25, 3
      %p247 = por %p245, %p246
      %p249 = scmp.ne.s32.totalorder %s232, %s248
      %p250 = scmp.eq.s32.totalorder %s25, 0
      %p251 = por %p249, %p250
      %p252 = scmp.le.s32.totalorder 1, %s19
      %p253 = scmp.lt.s32.totalorder %s19, 5
      %p254 = pnand %p252, %p253
      %p255 = pneg %p254
      // Predicated region
      $region9: #{reward_model_forward.1} parent=5 // pred_check
        _
      $region10: #{reward_model_forward.1} parent=5 // pred_check_branch
        %257 = sbr.rel (%p254) target = $region12
      $region11: #{reward_model_forward.1} parent=5 // pred_region
        %s258 = ssub.s32 %s19, 1
        // Predicated region
        $region13: #{reward_model_forward.1} parent=11 // pred_check
          %p259 = pneg %p92
        $region14: #{reward_model_forward.1} parent=11 // pred_check_branch
          %261 = sbr.rel (%p259) target = $region16
        $region15: #{reward_model_forward.1} parent=11 // pred_region
          _
        $region16: #{reward_model_forward.1} parent=11 // pred_fallthru
          _
        // Predicated region
        $region17: #{reward_model_forward.1} parent=11 // pred_check
          %p262 = pneg %p113
        $region18: #{reward_model_forward.1} parent=11 // pred_check_branch
          %264 = sbr.rel (%p262) target = $region20
        $region19: #{reward_model_forward.1} parent=11 // pred_region
          _
        $region20: #{reward_model_forward.1} parent=11 // pred_fallthru
          _
        // Predicated region
        $region21: #{reward_model_forward.1} parent=11 // pred_check
          %p265 = pneg %p134
        $region22: #{reward_model_forward.1} parent=11 // pred_check_branch
          %267 = sbr.rel (%p265) target = $region24
        $region23: #{reward_model_forward.1} parent=11 // pred_region
          _
        $region24: #{reward_model_forward.1} parent=11 // pred_fallthru
          _
        // Predicated region
        $region25: #{reward_model_forward.1} parent=11 // pred_check
          %p268 = pneg %p155
        $region26: #{reward_model_forward.1} parent=11 // pred_check_branch
          %270 = sbr.rel (%p268) target = $region28
        $region27: #{reward_model_forward.1} parent=11 // pred_region
          _
        $region28: #{reward_model_forward.1} parent=11 // pred_fallthru
          _
        // Predicated region
        $region29: #{reward_model_forward.1} parent=11 // pred_check
          %p271 = pneg %p176
        $region30: #{reward_model_forward.1} parent=11 // pred_check_branch
          %273 = sbr.rel (%p271) target = $region32
        $region31: #{reward_model_forward.1} parent=11 // pred_region
          _
        $region32: #{reward_model_forward.1} parent=11 // pred_fallthru
          _
        // Predicated region
        $region33: #{reward_model_forward.1} parent=11 // pred_check
          %p274 = pneg %p197
        $region34: #{reward_model_forward.1} parent=11 // pred_check_branch
          %276 = sbr.rel (%p274) target = $region36
        $region35: #{reward_model_forward.1} parent=11 // pred_region
          _
        $region36: #{reward_model_forward.1} parent=11 // pred_fallthru
          _
        // Predicated region
        $region37: #{reward_model_forward.1} parent=11 // pred_check
          %p277 = pneg %p218
        $region38: #{reward_model_forward.1} parent=11 // pred_check_branch
          %279 = sbr.rel (%p277) target = $region40
        $region39: #{reward_model_forward.1} parent=11 // pred_region
          _
        $region40: #{reward_model_forward.1} parent=11 // pred_fallthru
          _
      $region12: #{reward_model_forward.1} parent=5 // pred_fallthru
        _
      %p280 = scmp.lt.s32.totalorder %s19, 4
      // Predicated region
      $region41: #{reward_model_forward.1} parent=5 // pred_check
        %p281 = pneg %p280
      $region42: #{reward_model_forward.1} parent=5 // pred_check_branch
        %283 = sbr.rel (%p281) target = $region44
      $region43: #{reward_model_forward.1} parent=5 // pred_region
        // Predicated region
        $region45: #{reward_model_forward.1} parent=43 // pred_check
          %p284 = pneg %p39
        $region46: #{reward_model_forward.1} parent=43 // pred_check_branch
          %286 = sbr.rel (%p284) target = $region48
        $region47: #{reward_model_forward.1} parent=43 // pred_region
          %s287 = smul.u32 16, %s19
          %p288 = scmp.lt.s32.totalorder %s287, 63
          %s289 = scalar_select %p288, %s287, 63
          %s290 = smul.addr %s289, 4
          %s291 = scalar_lea.vmem %s0, %s290
          %s292 = smul.u32 16, %s19
        $region48: #{reward_model_forward.1} parent=43 // pred_fallthru
          _
        // Predicated region
        $region49: #{reward_model_forward.1} parent=43 // pred_check
          %p293 = pneg %p65
        $region50: #{reward_model_forward.1} parent=43 // pred_check_branch
          %295 = sbr.rel (%p293) target = $region52
        $region51: #{reward_model_forward.1} parent=43 // pred_region
          %s296 = smul.u32 16, %s19
          %p297 = scmp.lt.s32.totalorder %s296, 63
          %s298 = scalar_select %p297, %s296, 63
          %s299 = smul.addr %s298, 4
          %s300 = scalar_lea.vmem %s1, %s299
          %s301 = smul.u32 16, %s19
        $region52: #{reward_model_forward.1} parent=43 // pred_fallthru
          _
      $region44: #{reward_model_forward.1} parent=5 // pred_fallthru
        _
      %p302 = scmp.le.s32.totalorder 1, %s19
      %p303 = scmp.lt.s32.totalorder %s19, 5
      %p304 = pnand %p302, %p303
      %p305 = pneg %p304
      // Predicated region
      $region53: #{reward_model_forward.1} parent=5 // pred_check
        _
      $region54: #{reward_model_forward.1} parent=5 // pred_check_branch
        %307 = sbr.rel (%p304) target = $region56
      $region55: #{reward_model_forward.1} parent=5 // pred_region
        %s308 = ssub.s32 %s19, 1
        %s309 = smul.u32 16, %s24
        %p310 = scmp.lt.s32.totalorder %s309, 63
        %s311 = scalar_select %p310, %s309, 63
        %s312 = smul.addr %s311, 4
        %s313 = scalar_lea.vmem %s0, %s312
        %p314 = pneg %p45
        %p315 = pneg %p42
        %s316 = smul.u32 16, %s24
        %p317 = scmp.lt.s32.totalorder %s316, 63
        %s318 = scalar_select %p317, %s316, 63
        %s319 = smul.addr %s318, 4
        %s320 = scalar_lea.vmem %s1, %s319
        %p321 = pneg %p71
        %p322 = pneg %p68
        %p323 = pneg %p92
        %p324 = pneg %p89
        %p325 = pneg %p113
        %p326 = pneg %p110
        %p327 = pneg %p134
        %p328 = pneg %p131
        %p329 = pneg %p155
        %p330 = pneg %p152
        %p331 = pneg %p176
        %p332 = pneg %p173
        %p333 = pneg %p197
        %p334 = pneg %p194
        %p335 = pneg %p218
        %p336 = pneg %p215
        %p337 = pneg %p244
        %p338 = pneg %p241
        %s339 = sand.u32 %s231, 1
        %s340 = scalar_lea.sflag [#allocation4], %s339
        %s341 = sand.u32 %s231, 1
        %s342 = scalar_lea.vmem [#allocation3], %s341
        %s343 = smul.u32 16, %s24
        %p344 = scmp.lt.s32.totalorder %s343, 63
        %s345 = scalar_select %p344, %s343, 63
        %s346 = smul.addr %s345, 4
        %s347 = scalar_lea.vmem %s0, %s346
        %s348 = smul.u32 16, %s24
        %s349 = smul.u32 16, %s24
        %p350 = scmp.lt.s32.totalorder %s349, 63
        %s351 = scalar_select %p350, %s349, 63
        %s352 = smul.addr %s351, 4
        %s353 = scalar_lea.vmem %s1, %s352
        %s354 = smul.u32 16, %s24
        %v356 = vld [vmem:[%s347] sm:$0xf]
        %v357 = vld [vmem:[%s347 + $0x4] sm:$0xf]
        %v358 = vld [vmem:[%s347 + $0x8] sm:$0xf]
        %v359 = vld [vmem:[%s347 + $0xc] sm:$0xf]
        %v360 = vld [vmem:[%s347 + $0x10] sm:$0xf]
        %v361 = vld [vmem:[%s347 + $0x14] sm:$0xf]
        %v362 = vld [vmem:[%s347 + $0x18] sm:$0xf]
        %v363 = vld [vmem:[%s347 + $0x1c] sm:$0xf]
        %v364 = vld [vmem:[%s347 + $0x20] sm:$0xf]
        %v365 = vld [vmem:[%s347 + $0x24] sm:$0xf]
        %v366 = vld [vmem:[%s347 + $0x28] sm:$0xf]
        %v367 = vld [vmem:[%s347 + $0x2c] sm:$0xf]
        %v368 = vld [vmem:[%s347 + $0x30] sm:$0xf]
        %v369 = vld [vmem:[%s347 + $0x34] sm:$0xf]
        %v370 = vld [vmem:[%s347 + $0x38] sm:$0xf]
        %v371 = vld [vmem:[%s347 + $0x3c] sm:$0xf]
        %v372 = vld [vmem:[%s2] sm:$0xf]
        %v373 = vld [vmem:[%s2 + $0x4] sm:$0xf]
        %v374 = vld [vmem:[%s2 + $0x8] sm:$0xf]
        %v375 = vld [vmem:[%s2 + $0xc] sm:$0xf]
        %v376 = vld [vmem:[%s353] sm:$0xf]
        %v377 = vld [vmem:[%s353 + $0x4] sm:$0xf]
        %v378 = vld [vmem:[%s353 + $0x8] sm:$0xf]
        %v379 = vld [vmem:[%s353 + $0xc] sm:$0xf]
        %v380 = vld [vmem:[%s353 + $0x10] sm:$0xf]
        %v381 = vld [vmem:[%s353 + $0x14] sm:$0xf]
        %v382 = vld [vmem:[%s353 + $0x18] sm:$0xf]
        %v383 = vld [vmem:[%s353 + $0x1c] sm:$0xf]
        %v384 = vld [vmem:[%s353 + $0x20] sm:$0xf]
        %v385 = vld [vmem:[%s353 + $0x24] sm:$0xf]
        %v386 = vld [vmem:[%s353 + $0x28] sm:$0xf]
        %v387 = vld [vmem:[%s353 + $0x2c] sm:$0xf]
        %v388 = vld [vmem:[%s353 + $0x30] sm:$0xf]
        %v389 = vld [vmem:[%s353 + $0x34] sm:$0xf]
        %v390 = vld [vmem:[%s353 + $0x38] sm:$0xf]
        %v391 = vld [vmem:[%s353 + $0x3c] sm:$0xf]
        %v392 = vld [vmem:[%s3] sm:$0xf]
        %v409 = vunpack.c.l.b16 %v376
        %v410 = vunpack.c.l.b16 %v377
        %v411 = vunpack.c.l.b16 %v378
        %v412 = vunpack.c.l.b16 %v379
        %v413 = vunpack.c.l.b16 %v380
        %v414 = vunpack.c.l.b16 %v381
        %v415 = vunpack.c.l.b16 %v382
        %v416 = vunpack.c.l.b16 %v383
        %v417 = vunpack.c.l.b16 %v384
        %v418 = vunpack.c.l.b16 %v385
        %v419 = vunpack.c.l.b16 %v386
        %v420 = vunpack.c.l.b16 %v387
        %v421 = vunpack.c.l.b16 %v388
        %v422 = vunpack.c.l.b16 %v389
        %v423 = vunpack.c.l.b16 %v390
        %v424 = vunpack.c.l.b16 %v391
        %v425 = vpack.c.b16 %v410, %v409
        %v426 = vpack.c.b16 %v412, %v411
        %v427 = vpack.c.b16 %v414, %v413
        %v428 = vpack.c.b16 %v416, %v415
        %v429 = vpack.c.b16 %v418, %v417
        %v430 = vpack.c.b16 %v420, %v419
        %v431 = vpack.c.b16 %v422, %v421
        %v432 = vpack.c.b16 %v424, %v423
        %vm433 = vcmask 64512
        %v435 = vsel %vm433, %v425, 0
        %v438 = vsel %vm433, %v426, 0
        %v441 = vsel %vm433, %v427, 0
        %v444 = vsel %vm433, %v428, 0
        %v447 = vsel %vm433, %v429, 0
        %v450 = vsel %vm433, %v430, 0
        %v453 = vsel %vm433, %v431, 0
        %v456 = vsel %vm433, %v432, 0
        %vm458 = vcmask 1043456
        %v460 = vsel %vm458, %v392, 0
        %462 = vmatprep.subr.bf16.mxu0 0
        %463 = vmatpush1.bf16.msra.mxu0 %v460
        %464 = vmatprep.subr.bf16.mxu0 0
        %465 = vmatpush1.bf16.msra.mxu0 0
        %466 = vmatprep.subr.bf16.mxu0 0
        %467 = vmatpush1.bf16.msra.mxu0 0
        %468 = vmatprep.subr.bf16.mxu0 0
        %469 = vmatpush1.bf16.msra.mxu0 0
        %470 = vmatprep.subr.bf16.mxu0 0
        %471 = vmatpush1.bf16.msra.mxu0 0
        %472 = vmatprep.subr.bf16.mxu0 0
        %473 = vmatpush1.bf16.msra.mxu0 0
        %474 = vmatprep.subr.bf16.mxu0 0
        %475 = vmatpush1.bf16.msra.mxu0 0
        %476 = vmatprep.subr.bf16.mxu0 0
        %477 = vmatpush1.bf16.msra.mxu0 0
        %478 = vmatprep.subr.bf16.mxu0 0
        %479 = vmatpush1.bf16.msra.mxu0 0
        %480 = vmatprep.subr.bf16.mxu0 0
        %481 = vmatpush1.bf16.msra.mxu0 0
        %482 = vmatprep.subr.bf16.mxu0 0
        %483 = vmatpush1.bf16.msra.mxu0 0
        %484 = vmatprep.subr.bf16.mxu0 0
        %485 = vmatpush1.bf16.msra.mxu0 0
        %486 = vmatprep.subr.bf16.mxu0 0
        %487 = vmatpush1.bf16.msra.mxu0 0
        %488 = vmatprep.subr.bf16.mxu0 0
        %489 = vmatpush1.bf16.msra.mxu0 0
        %490 = vmatprep.subr.bf16.mxu0 0
        %491 = vmatpush1.bf16.msra.mxu0 0
        %492 = vmatprep.subr.bf16.mxu0 0
        %493 = vmatpush1.bf16.msra.mxu0 0
        %494 = vmatprep.mubr.bf16.mxu0 0
        %495 = vmatmul.mubr.bf16.gmra.mrb[0].mxu0 %v435
        %v496 = vpop.f32.mrb[0].mxu0
        %v497 = vadd.f32 0.0, %v496
        %v498 = vpop.f32.mrb[0].mxu0
        %v499 = vpop.f32.mrb[0].mxu0
        %v500 = vadd.f32 0.0, %v499
        %v501 = vpop.f32.mrb[0].mxu0
        %502 = vmatprep.mubr.bf16.mxu0 0
        %503 = vmatmul.mubr.bf16.gmra.mrb[0].mxu0 %v438
        %v504 = vpop.f32.mrb[0].mxu0
        %v505 = vadd.f32 0.0, %v504
        %v506 = vpop.f32.mrb[0].mxu0
        %v507 = vpop.f32.mrb[0].mxu0
        %v508 = vadd.f32 0.0, %v507
        %v509 = vpop.f32.mrb[0].mxu0
        %510 = vmatprep.mubr.bf16.mxu0 0
        %511 = vmatmul.mubr.bf16.gmra.mrb[0].mxu0 %v441
        %v512 = vpop.f32.mrb[0].mxu0
        %v513 = vadd.f32 0.0, %v512
        %v514 = vpop.f32.mrb[0].mxu0
        %v515 = vpop.f32.mrb[0].mxu0
        %v516 = vadd.f32 0.0, %v515
        %v517 = vpop.f32.mrb[0].mxu0
        %518 = vmatprep.mubr.bf16.mxu0 0
        %519 = vmatmul.mubr.bf16.gmra.mrb[0].mxu0 %v444
        %v520 = vpop.f32.mrb[0].mxu0
        %v521 = vadd.f32 0.0, %v520
        %v522 = vpop.f32.mrb[0].mxu0
        %v523 = vpop.f32.mrb[0].mxu0
        %v524 = vadd.f32 0.0, %v523
        %v525 = vpop.f32.mrb[0].mxu0
        %526 = vmatprep.mubr.bf16.mxu0 0
        %527 = vmatmul.mubr.bf16.gmra.mrb[0].mxu0 %v447
        %v528 = vpop.f32.mrb[0].mxu0
        %v529 = vadd.f32 0.0, %v528
        %v530 = vpop.f32.mrb[0].mxu0
        %v531 = vpop.f32.mrb[0].mxu0
        %v532 = vadd.f32 0.0, %v531
        %v533 = vpop.f32.mrb[0].mxu0
        %534 = vmatprep.mubr.bf16.mxu0 0
        %535 = vmatmul.mubr.bf16.gmra.mrb[0].mxu0 %v450
        %v536 = vpop.f32.mrb[0].mxu0
        %v537 = vadd.f32 0.0, %v536
        %v538 = vpop.f32.mrb[0].mxu0
        %v539 = vpop.f32.mrb[0].mxu0
        %v540 = vadd.f32 0.0, %v539
        %v541 = vpop.f32.mrb[0].mxu0
        %542 = vmatprep.mubr.bf16.mxu0 0
        %543 = vmatmul.mubr.bf16.gmra.mrb[0].mxu0 %v453
        %v544 = vpop.f32.mrb[0].mxu0
        %v545 = vadd.f32 0.0, %v544
        %v546 = vpop.f32.mrb[0].mxu0
        %v547 = vpop.f32.mrb[0].mxu0
        %v548 = vadd.f32 0.0, %v547
        %v549 = vpop.f32.mrb[0].mxu0
        %550 = vmatprep.mubr.bf16.mxu0 0
        %551 = vmatmul.mubr.bf16.gmra.mrb[0].mxu0 %v456
        %v552 = vpop.f32.mrb[0].mxu0
        %v553 = vadd.f32 0.0, %v552
        %v554 = vpop.f32.mrb[0].mxu0
        %v555 = vpop.f32.mrb[0].mxu0
        %v556 = vadd.f32 0.0, %v555
        %v557 = vpop.f32.mrb[0].mxu0
        %558 = vdwg.mxu0
        %v575 = vunpack.c.l.b16 %v356
        %v576 = vunpack.c.l.b16 %v357
        %v577 = vunpack.c.l.b16 %v358
        %v578 = vunpack.c.l.b16 %v359
        %v579 = vunpack.c.l.b16 %v360
        %v580 = vunpack.c.l.b16 %v361
        %v581 = vunpack.c.l.b16 %v362
        %v582 = vunpack.c.l.b16 %v363
        %v583 = vunpack.c.l.b16 %v364
        %v584 = vunpack.c.l.b16 %v365
        %v585 = vunpack.c.l.b16 %v366
        %v586 = vunpack.c.l.b16 %v367
        %v587 = vunpack.c.l.b16 %v368
        %v588 = vunpack.c.l.b16 %v369
        %v589 = vunpack.c.l.b16 %v370
        %v590 = vunpack.c.l.b16 %v371
        %v591 = vpack.c.b16 %v576, %v575
        %v592 = vpack.c.b16 %v578, %v577
        %v593 = vpack.c.b16 %v580, %v579
        %v594 = vpack.c.b16 %v582, %v581
        %v595 = vpack.c.b16 %v584, %v583
        %v596 = vpack.c.b16 %v586, %v585
        %v597 = vpack.c.b16 %v588, %v587
        %v598 = vpack.c.b16 %v590, %v589
        %v603 = vunpack.c.l.b16 %v372
        %v604 = vunpack.c.l.b16 %v373
        %v605 = vunpack.c.l.b16 %v374
        %v606 = vunpack.c.l.b16 %v375
        %v607 = vpack.c.b16 %v604, %v603
        %v608 = vpack.c.b16 %v606, %v605
        %vm611 = vcmask 261120
        %v613 = vsel %vm611, %v591, 0
        %v616 = vsel %vm611, %v592, 0
        %v619 = vsel %vm611, %v593, 0
        %v622 = vsel %vm611, %v594, 0
        %v625 = vsel %vm611, %v595, 0
        %v628 = vsel %vm611, %v596, 0
        %v631 = vsel %vm611, %v597, 0
        %v634 = vsel %vm611, %v598, 0
        %636 = vmatprep.subr.bf16.mxu0 0
        %637 = vmatpush1.bf16.msra.mxu0 %v607
        %638 = vmatprep.subr.bf16.mxu0 0
        %639 = vmatpush1.bf16.msra.mxu0 %v608
        %640 = vmatprep.subr.bf16.mxu0 0
        %641 = vmatpush1.bf16.msra.mxu0 0
        %642 = vmatprep.subr.bf16.mxu0 0
        %643 = vmatpush1.bf16.msra.mxu0 0
        %644 = vmatprep.subr.bf16.mxu0 0
        %645 = vmatpush1.bf16.msra.mxu0 0
        %646 = vmatprep.subr.bf16.mxu0 0
        %647 = vmatpush1.bf16.msra.mxu0 0
        %648 = vmatprep.subr.bf16.mxu0 0
        %649 = vmatpush1.bf16.msra.mxu0 0
        %650 = vmatprep.subr.bf16.mxu0 0
        %651 = vmatpush1.bf16.msra.mxu0 0
        %652 = vmatprep.subr.bf16.mxu0 0
        %653 = vmatpush1.bf16.msra.mxu0 0
        %654 = vmatprep.subr.bf16.mxu0 0
        %655 = vmatpush1.bf16.msra.mxu0 0
        %656 = vmatprep.subr.bf16.mxu0 0
        %657 = vmatpush1.bf16.msra.mxu0 0
        %658 = vmatprep.subr.bf16.mxu0 0
        %659 = vmatpush1.bf16.msra.mxu0 0
        %660 = vmatprep.subr.bf16.mxu0 0
        %661 = vmatpush1.bf16.msra.mxu0 0
        %662 = vmatprep.subr.bf16.mxu0 0
        %663 = vmatpush1.bf16.msra.mxu0 0
        %664 = vmatprep.subr.bf16.mxu0 0
        %665 = vmatpush1.bf16.msra.mxu0 0
        %666 = vmatprep.subr.bf16.mxu0 0
        %667 = vmatpush1.bf16.msra.mxu0 0
        %668 = vmatprep.mubr.bf16.mxu0 0
        %669 = vmatmul.mubr.bf16.gmra.mrb[0].mxu0 %v613
        %v670 = vpop.f32.mrb[0].mxu0
        %v671 = vadd.f32 %v497, %v670
        %v672 = vpop.f32.mrb[0].mxu0
        %v673 = vpop.f32.mrb[0].mxu0
        %v674 = vadd.f32 %v500, %v673
        %v675 = vpop.f32.mrb[0].mxu0
        %676 = vmatprep.mubr.bf16.mxu0 0
        %677 = vmatmul.mubr.bf16.gmra.mrb[0].mxu0 %v616
        %v678 = vpop.f32.mrb[0].mxu0
        %v679 = vadd.f32 %v505, %v678
        %v680 = vpop.f32.mrb[0].mxu0
        %v681 = vpop.f32.mrb[0].mxu0
        %v682 = vadd.f32 %v508, %v681
        %v683 = vpop.f32.mrb[0].mxu0
        %684 = vmatprep.mubr.bf16.mxu0 0
        %685 = vmatmul.mubr.bf16.gmra.mrb[0].mxu0 %v619
        %v686 = vpop.f32.mrb[0].mxu0
        %v687 = vadd.f32 %v513, %v686
        %v688 = vpop.f32.mrb[0].mxu0
        %v689 = vpop.f32.mrb[0].mxu0
        %v690 = vadd.f32 %v516, %v689
        %v691 = vpop.f32.mrb[0].mxu0
        %692 = vmatprep.mubr.bf16.mxu0 0
        %693 = vmatmul.mubr.bf16.gmra.mrb[0].mxu0 %v622
        %v694 = vpop.f32.mrb[0].mxu0
        %v695 = vadd.f32 %v521, %v694
        %v696 = vpop.f32.mrb[0].mxu0
        %v697 = vpop.f32.mrb[0].mxu0
        %v698 = vadd.f32 %v524, %v697
        %v699 = vpop.f32.mrb[0].mxu0
        %700 = vmatprep.mubr.bf16.mxu0 0
        %701 = vmatmul.mubr.bf16.gmra.mrb[0].mxu0 %v625
        %v702 = vpop.f32.mrb[0].mxu0
        %v703 = vadd.f32 %v529, %v702
        %v704 = vpop.f32.mrb[0].mxu0
        %v705 = vpop.f32.mrb[0].mxu0
        %v706 = vadd.f32 %v532, %v705
        %v707 = vpop.f32.mrb[0].mxu0
        %708 = vmatprep.mubr.bf16.mxu0 0
        %709 = vmatmul.mubr.bf16.gmra.mrb[0].mxu0 %v628
        %v710 = vpop.f32.mrb[0].mxu0
        %v711 = vadd.f32 %v537, %v710
        %v712 = vpop.f32.mrb[0].mxu0
        %v713 = vpop.f32.mrb[0].mxu0
        %v714 = vadd.f32 %v540, %v713
        %v715 = vpop.f32.mrb[0].mxu0
        %716 = vmatprep.mubr.bf16.mxu0 0
        %717 = vmatmul.mubr.bf16.gmra.mrb[0].mxu0 %v631
        %v718 = vpop.f32.mrb[0].mxu0
        %v719 = vadd.f32 %v545, %v718
        %v720 = vpop.f32.mrb[0].mxu0
        %v721 = vpop.f32.mrb[0].mxu0
        %v722 = vadd.f32 %v548, %v721
        %v723 = vpop.f32.mrb[0].mxu0
        %724 = vmatprep.mubr.bf16.mxu0 0
        %725 = vmatmul.mubr.bf16.gmra.mrb[0].mxu0 %v634
        %v726 = vpop.f32.mrb[0].mxu0
        %v727 = vadd.f32 %v553, %v726
        %v728 = vpop.f32.mrb[0].mxu0
        %v729 = vpop.f32.mrb[0].mxu0
        %v730 = vadd.f32 %v556, %v729
        %v731 = vpop.f32.mrb[0].mxu0
        %732 = vdwg.mxu0
        %v733 = vld [vmem:[%s4] sm:$0x1]
        %v735 = vlaneseq
        %v736 = vshrl.u32 %v735, 7
        %v737 = vsub.s32 0, %v736
        %v738 = vrot.slane %v733, %v737
        %v740 = vadd.f32 %v671, %v738
        %v741 = vadd.f32 %v674, %v738
        %v742 = vadd.f32 %v679, %v738
        %v743 = vadd.f32 %v682, %v738
        %v744 = vadd.f32 %v687, %v738
        %v745 = vadd.f32 %v690, %v738
        %v746 = vadd.f32 %v695, %v738
        %v747 = vadd.f32 %v698, %v738
        %v748 = vadd.f32 %v703, %v738
        %v749 = vadd.f32 %v706, %v738
        %v750 = vadd.f32 %v711, %v738
        %v751 = vadd.f32 %v714, %v738
        %v752 = vadd.f32 %v719, %v738
        %v753 = vadd.f32 %v722, %v738
        %v754 = vadd.f32 %v727, %v738
        %v755 = vadd.f32 %v730, %v738
        %v756 = vmax.f32 %v740, 0.0
        %v757 = vmax.f32 %v741, 0.0
        %v758 = vmax.f32 %v742, 0.0
        %v759 = vmax.f32 %v743, 0.0
        %v760 = vmax.f32 %v744, 0.0
        %v761 = vmax.f32 %v745, 0.0
        %v762 = vmax.f32 %v746, 0.0
        %v763 = vmax.f32 %v747, 0.0
        %v764 = vmax.f32 %v748, 0.0
        %v765 = vmax.f32 %v749, 0.0
        %v766 = vmax.f32 %v750, 0.0
        %v767 = vmax.f32 %v751, 0.0
        %v768 = vmax.f32 %v752, 0.0
        %v769 = vmax.f32 %v753, 0.0
        %v770 = vmax.f32 %v754, 0.0
        %v771 = vmax.f32 %v755, 0.0
        %v772 = vpack.c.bf16 %v757, %v756
        %v773 = vpack.c.bf16 %v759, %v758
        %v774 = vpack.c.bf16 %v761, %v760
        %v775 = vpack.c.bf16 %v763, %v762
        %v776 = vpack.c.bf16 %v765, %v764
        %v777 = vpack.c.bf16 %v767, %v766
        %v778 = vpack.c.bf16 %v769, %v768
        %v779 = vpack.c.bf16 %v771, %v770
        %v780 = vld [vmem:[%s5] sm:$0xf]
        %v781 = vld [vmem:[%s5 + $0x4] sm:$0xf]
        %v782 = vld [vmem:[%s5 + $0x8] sm:$0xf]
        %v783 = vld [vmem:[%s5 + $0xc] sm:$0xf]
        %v784 = vld [vmem:[%s5 + $0x10] sm:$0xf]
        %v785 = vld [vmem:[%s5 + $0x14] sm:$0xf]
        %v786 = vld [vmem:[%s5 + $0x18] sm:$0xf]
        %v787 = vld [vmem:[%s5 + $0x1c] sm:$0xf]
        %v788 = vld [vmem:[%s5 + $0x20] sm:$0xf]
        %v789 = vld [vmem:[%s5 + $0x24] sm:$0xf]
        %v790 = vld [vmem:[%s5 + $0x28] sm:$0xf]
        %v791 = vld [vmem:[%s5 + $0x2c] sm:$0xf]
        %v792 = vld [vmem:[%s5 + $0x30] sm:$0xf]
        %v793 = vld [vmem:[%s5 + $0x34] sm:$0xf]
        %v794 = vld [vmem:[%s5 + $0x38] sm:$0xf]
        %v795 = vld [vmem:[%s5 + $0x3c] sm:$0xf]
        %v796 = vld [vmem:[%s6] sm:$0x1]
        %v798 = vlaneseq
        %v799 = vshrl.u32 %v798, 7
        %v800 = vsub.s32 0, %v799
        %v801 = vrot.slane %v796, %v800
        %v819 = vunpack.c.l.b16 %v780
        %v820 = vunpack.c.l.b16 %v781
        %v821 = vunpack.c.l.b16 %v782
        %v822 = vunpack.c.l.b16 %v783
        %v823 = vunpack.c.l.b16 %v784
        %v824 = vunpack.c.l.b16 %v785
        %v825 = vunpack.c.l.b16 %v786
        %v826 = vunpack.c.l.b16 %v787
        %v827 = vunpack.c.l.b16 %v788
        %v828 = vunpack.c.l.b16 %v789
        %v829 = vunpack.c.l.b16 %v790
        %v830 = vunpack.c.l.b16 %v791
        %v831 = vunpack.c.l.b16 %v792
        %v832 = vunpack.c.l.b16 %v793
        %v833 = vunpack.c.l.b16 %v794
        %v834 = vunpack.c.l.b16 %v795
        %v835 = vpack.c.b16 %v820, %v819
        %v836 = vpack.c.b16 %v822, %v821
        %v837 = vpack.c.b16 %v824, %v823
        %v838 = vpack.c.b16 %v826, %v825
        %v839 = vpack.c.b16 %v828, %v827
        %v840 = vpack.c.b16 %v830, %v829
        %v841 = vpack.c.b16 %v832, %v831
        %v842 = vpack.c.b16 %v834, %v833
        %851 = vmatprep.subr.bf16.mxu0 0
        %852 = vmatpush1.bf16.msra.mxu0 %v835
        %853 = vmatprep.subr.bf16.mxu0 0
        %854 = vmatpush1.bf16.msra.mxu0 %v836
        %855 = vmatprep.subr.bf16.mxu0 0
        %856 = vmatpush1.bf16.msra.mxu0 %v837
        %857 = vmatprep.subr.bf16.mxu0 0
        %858 = vmatpush1.bf16.msra.mxu0 %v838
        %859 = vmatprep.subr.bf16.mxu0 0
        %860 = vmatpush1.bf16.msra.mxu0 %v839
        %861 = vmatprep.subr.bf16.mxu0 0
        %862 = vmatpush1.bf16.msra.mxu0 %v840
        %863 = vmatprep.subr.bf16.mxu0 0
        %864 = vmatpush1.bf16.msra.mxu0 %v841
        %865 = vmatprep.subr.bf16.mxu0 0
        %866 = vmatpush1.bf16.msra.mxu0 %v842
        %867 = vmatprep.subr.bf16.mxu0 0
        %868 = vmatpush1.bf16.msra.mxu0 0
        %869 = vmatprep.subr.bf16.mxu0 0
        %870 = vmatpush1.bf16.msra.mxu0 0
        %871 = vmatprep.subr.bf16.mxu0 0
        %872 = vmatpush1.bf16.msra.mxu0 0
        %873 = vmatprep.subr.bf16.mxu0 0
        %874 = vmatpush1.bf16.msra.mxu0 0
        %875 = vmatprep.subr.bf16.mxu0 0
        %876 = vmatpush1.bf16.msra.mxu0 0
        %877 = vmatprep.subr.bf16.mxu0 0
        %878 = vmatpush1.bf16.msra.mxu0 0
        %879 = vmatprep.subr.bf16.mxu0 0
        %880 = vmatpush1.bf16.msra.mxu0 0
        %881 = vmatprep.subr.bf16.mxu0 0
        %882 = vmatpush1.bf16.msra.mxu0 0
        %883 = vmatprep.mubr.bf16.mxu0 0
        %884 = vmatmul.mubr.bf16.gmra.mrb[0].mxu0 %v772
        %v885 = vpop.f32.mrb[0].mxu0
        %v886 = vadd.f32 %v801, %v885
        %v887 = vpop.f32.mrb[0].mxu0
        %v888 = vpop.f32.mrb[0].mxu0
        %v889 = vadd.f32 %v801, %v888
        %v890 = vpop.f32.mrb[0].mxu0
        %891 = vmatprep.mubr.bf16.mxu0 0
        %892 = vmatmul.mubr.bf16.gmra.mrb[0].mxu0 %v773
        %v893 = vpop.f32.mrb[0].mxu0
        %v894 = vadd.f32 %v801, %v893
        %v895 = vpop.f32.mrb[0].mxu0
        %v896 = vpop.f32.mrb[0].mxu0
        %v897 = vadd.f32 %v801, %v896
        %v898 = vpop.f32.mrb[0].mxu0
        %899 = vmatprep.mubr.bf16.mxu0 0
        %900 = vmatmul.mubr.bf16.gmra.mrb[0].mxu0 %v774
        %v901 = vpop.f32.mrb[0].mxu0
        %v902 = vadd.f32 %v801, %v901
        %v903 = vpop.f32.mrb[0].mxu0
        %v904 = vpop.f32.mrb[0].mxu0
        %v905 = vadd.f32 %v801, %v904
        %v906 = vpop.f32.mrb[0].mxu0
        %907 = vmatprep.mubr.bf16.mxu0 0
        %908 = vmatmul.mubr.bf16.gmra.mrb[0].mxu0 %v775
        %v909 = vpop.f32.mrb[0].mxu0
        %v910 = vadd.f32 %v801, %v909
        %v911 = vpop.f32.mrb[0].mxu0
        %v912 = vpop.f32.mrb[0].mxu0
        %v913 = vadd.f32 %v801, %v912
        %v914 = vpop.f32.mrb[0].mxu0
        %915 = vmatprep.mubr.bf16.mxu0 0
        %916 = vmatmul.mubr.bf16.gmra.mrb[0].mxu0 %v776
        %v917 = vpop.f32.mrb[0].mxu0
        %v918 = vadd.f32 %v801, %v917
        %v919 = vpop.f32.mrb[0].mxu0
        %v920 = vpop.f32.mrb[0].mxu0
        %v921 = vadd.f32 %v801, %v920
        %v922 = vpop.f32.mrb[0].mxu0
        %923 = vmatprep.mubr.bf16.mxu0 0
        %924 = vmatmul.mubr.bf16.gmra.mrb[0].mxu0 %v777
        %v925 = vpop.f32.mrb[0].mxu0
        %v926 = vadd.f32 %v801, %v925
        %v927 = vpop.f32.mrb[0].mxu0
        %v928 = vpop.f32.mrb[0].mxu0
        %v929 = vadd.f32 %v801, %v928
        %v930 = vpop.f32.mrb[0].mxu0
        %931 = vmatprep.mubr.bf16.mxu0 0
        %932 = vmatmul.mubr.bf16.gmra.mrb[0].mxu0 %v778
        %v933 = vpop.f32.mrb[0].mxu0
        %v934 = vadd.f32 %v801, %v933
        %v935 = vpop.f32.mrb[0].mxu0
        %v936 = vpop.f32.mrb[0].mxu0
        %v937 = vadd.f32 %v801, %v936
        %v938 = vpop.f32.mrb[0].mxu0
        %939 = vmatprep.mubr.bf16.mxu0 0
        %940 = vmatmul.mubr.bf16.gmra.mrb[0].mxu0 %v779
        %v941 = vpop.f32.mrb[0].mxu0
        %v942 = vadd.f32 %v801, %v941
        %v943 = vpop.f32.mrb[0].mxu0
        %v944 = vpop.f32.mrb[0].mxu0
        %v945 = vadd.f32 %v801, %v944
        %v946 = vpop.f32.mrb[0].mxu0
        %947 = vdwg.mxu0
        %v948 = vmax.f32 %v886, 0.0
        %v949 = vmax.f32 %v889, 0.0
        %v950 = vmax.f32 %v894, 0.0
        %v951 = vmax.f32 %v897, 0.0
        %v952 = vmax.f32 %v902, 0.0
        %v953 = vmax.f32 %v905, 0.0
        %v954 = vmax.f32 %v910, 0.0
        %v955 = vmax.f32 %v913, 0.0
        %v956 = vmax.f32 %v918, 0.0
        %v957 = vmax.f32 %v921, 0.0
        %v958 = vmax.f32 %v926, 0.0
        %v959 = vmax.f32 %v929, 0.0
        %v960 = vmax.f32 %v934, 0.0
        %v961 = vmax.f32 %v937, 0.0
        %v962 = vmax.f32 %v942, 0.0
        %v963 = vmax.f32 %v945, 0.0
        %v964 = vld [vmem:[%s7] sm:$0x1]
        %v966 = vlaneseq
        %v967 = vshrl.u32 %v966, 7
        %v968 = vsub.s32 0, %v967
        %v969 = vrot.slane %v964, %v968
        %v971 = vmul.f32 %v948, %v969
        %v972 = vmul.f32 %v949, %v969
        %v973 = vmul.f32 %v950, %v969
        %v974 = vmul.f32 %v951, %v969
        %v975 = vmul.f32 %v952, %v969
        %v976 = vmul.f32 %v953, %v969
        %v977 = vmul.f32 %v954, %v969
        %v978 = vmul.f32 %v955, %v969
        %v979 = vmul.f32 %v956, %v969
        %v980 = vmul.f32 %v957, %v969
        %v981 = vmul.f32 %v958, %v969
        %v982 = vmul.f32 %v959, %v969
        %v983 = vmul.f32 %v960, %v969
        %v984 = vmul.f32 %v961, %v969
        %v985 = vmul.f32 %v962, %v969
        %v986 = vmul.f32 %v963, %v969
        %987 = vadd.xlane.f32.xlu0 %v971
        %v988 = vpop.xlane.xlu0 %987
        %989 = vadd.xlane.f32.xlu0 %v972
        %v990 = vpop.xlane.xlu0 %989
        %991 = vadd.xlane.f32.xlu0 %v973
        %v992 = vpop.xlane.xlu0 %991
        %993 = vadd.xlane.f32.xlu0 %v974
        %v994 = vpop.xlane.xlu0 %993
        %995 = vadd.xlane.f32.xlu0 %v975
        %v996 = vpop.xlane.xlu0 %995
        %997 = vadd.xlane.f32.xlu0 %v976
        %v998 = vpop.xlane.xlu0 %997
        %999 = vadd.xlane.f32.xlu0 %v977
        %v1000 = vpop.xlane.xlu0 %999
        %1001 = vadd.xlane.f32.xlu0 %v978
        %v1002 = vpop.xlane.xlu0 %1001
        %1003 = vadd.xlane.f32.xlu0 %v979
        %v1004 = vpop.xlane.xlu0 %1003
        %1005 = vadd.xlane.f32.xlu0 %v980
        %v1006 = vpop.xlane.xlu0 %1005
        %1007 = vadd.xlane.f32.xlu0 %v981
        %v1008 = vpop.xlane.xlu0 %1007
        %1009 = vadd.xlane.f32.xlu0 %v982
        %v1010 = vpop.xlane.xlu0 %1009
        %1011 = vadd.xlane.f32.xlu0 %v983
        %v1012 = vpop.xlane.xlu0 %1011
        %1013 = vadd.xlane.f32.xlu0 %v984
        %v1014 = vpop.xlane.xlu0 %1013
        %1015 = vadd.xlane.f32.xlu0 %v985
        %v1016 = vpop.xlane.xlu0 %1015
        %1017 = vadd.xlane.f32.xlu0 %v986
        %v1018 = vpop.xlane.xlu0 %1017
        %s1019 = sld [smem:[#allocation2]]
        %v1020 = vstv %s1019
        %v1021 = vadd.f32 %v988, %v1020
        %v1022 = vadd.f32 %v990, %v1020
        %v1023 = vadd.f32 %v992, %v1020
        %v1024 = vadd.f32 %v994, %v1020
        %v1025 = vadd.f32 %v996, %v1020
        %v1026 = vadd.f32 %v998, %v1020
        %v1027 = vadd.f32 %v1000, %v1020
        %v1028 = vadd.f32 %v1002, %v1020
        %v1029 = vadd.f32 %v1004, %v1020
        %v1030 = vadd.f32 %v1006, %v1020
        %v1031 = vadd.f32 %v1008, %v1020
        %v1032 = vadd.f32 %v1010, %v1020
        %v1033 = vadd.f32 %v1012, %v1020
        %v1034 = vadd.f32 %v1014, %v1020
        %v1035 = vadd.f32 %v1016, %v1020
        %v1036 = vadd.f32 %v1018, %v1020
        %v1053 = vlaneseq
        %v1054 = vand.u32 %v1053, 127
        %v1055 = vlaneseq
        %v1056 = vshrl.u32 %v1055, 7
        %v1057 = vsub.s32 %v1054, %v1056
        %v1058 = vrot.slane %v1021, %v1057
        %v1059 = vadd.s32 %v1054, 4294967288
        %v1060 = vlaneseq
        %v1061 = vshrl.u32 %v1060, 7
        %v1062 = vsub.s32 %v1059, %v1061
        %v1063 = vrot.slane %v1022, %v1062
        %vm1064 = vcmask 130112
        %v1065 = vsel %vm1064, %v1063, %v1058
        %v1066 = vadd.s32 %v1054, 4294967280
        %v1067 = vlaneseq
        %v1068 = vshrl.u32 %v1067, 7
        %v1069 = vsub.s32 %v1066, %v1068
        %v1070 = vrot.slane %v1023, %v1069
        %vm1071 = vcmask 195712
        %v1072 = vsel %vm1071, %v1070, %v1065
        %v1073 = vadd.s32 %v1054, 4294967272
        %v1074 = vlaneseq
        %v1075 = vshrl.u32 %v1074, 7
        %v1076 = vsub.s32 %v1073, %v1075
        %v1077 = vrot.slane %v1024, %v1076
        %vm1078 = vcmask 261312
        %v1079 = vsel %vm1078, %v1077, %v1072
        %v1080 = vadd.s32 %v1054, 4294967264
        %v1081 = vlaneseq
        %v1082 = vshrl.u32 %v1081, 7
        %v1083 = vsub.s32 %v1080, %v1082
        %v1084 = vrot.slane %v1025, %v1083
        %vm1085 = vcmask 326912
        %v1086 = vsel %vm1085, %v1084, %v1079
        %v1087 = vadd.s32 %v1054, 4294967256
        %v1088 = vlaneseq
        %v1089 = vshrl.u32 %v1088, 7
        %v1090 = vsub.s32 %v1087, %v1089
        %v1091 = vrot.slane %v1026, %v1090
        %vm1092 = vcmask 392512
        %v1093 = vsel %vm1092, %v1091, %v1086
        %v1094 = vadd.s32 %v1054, 4294967248
        %v1095 = vlaneseq
        %v1096 = vshrl.u32 %v1095, 7
        %v1097 = vsub.s32 %v1094, %v1096
        %v1098 = vrot.slane %v1027, %v1097
        %vm1099 = vcmask 458112
        %v1100 = vsel %vm1099, %v1098, %v1093
        %v1101 = vadd.s32 %v1054, 4294967240
        %v1102 = vlaneseq
        %v1103 = vshrl.u32 %v1102, 7
        %v1104 = vsub.s32 %v1101, %v1103
        %v1105 = vrot.slane %v1028, %v1104
        %vm1106 = vcmask 523712
        %v1107 = vsel %vm1106, %v1105, %v1100
        %v1108 = vadd.s32 %v1054, 4294967232
        %v1109 = vlaneseq
        %v1110 = vshrl.u32 %v1109, 7
        %v1111 = vsub.s32 %v1108, %v1110
        %v1112 = vrot.slane %v1029, %v1111
        %vm1113 = vcmask 589312
        %v1114 = vsel %vm1113, %v1112, %v1107
        %v1115 = vadd.s32 %v1054, 4294967224
        %v1116 = vlaneseq
        %v1117 = vshrl.u32 %v1116, 7
        %v1118 = vsub.s32 %v1115, %v1117
        %v1119 = vrot.slane %v1030, %v1118
        %vm1120 = vcmask 654912
        %v1121 = vsel %vm1120, %v1119, %v1114
        %v1122 = vadd.s32 %v1054, 4294967216
        %v1123 = vlaneseq
        %v1124 = vshrl.u32 %v1123, 7
        %v1125 = vsub.s32 %v1122, %v1124
        %v1126 = vrot.slane %v1031, %v1125
        %vm1127 = vcmask 720512
        %v1128 = vsel %vm1127, %v1126, %v1121
        %v1129 = vadd.s32 %v1054, 4294967208
        %v1130 = vlaneseq
        %v1131 = vshrl.u32 %v1130, 7
        %v1132 = vsub.s32 %v1129, %v1131
        %v1133 = vrot.slane %v1032, %v1132
        %vm1134 = vcmask 786112
        %v1135 = vsel %vm1134, %v1133, %v1128
        %v1136 = vadd.s32 %v1054, 4294967200
        %v1137 = vlaneseq
        %v1138 = vshrl.u32 %v1137, 7
        %v1139 = vsub.s32 %v1136, %v1138
        %v1140 = vrot.slane %v1033, %v1139
        %vm1141 = vcmask 851712
        %v1142 = vsel %vm1141, %v1140, %v1135
        %v1143 = vadd.s32 %v1054, 4294967192
        %v1144 = vlaneseq
        %v1145 = vshrl.u32 %v1144, 7
        %v1146 = vsub.s32 %v1143, %v1145
        %v1147 = vrot.slane %v1034, %v1146
        %vm1148 = vcmask 917312
        %v1149 = vsel %vm1148, %v1147, %v1142
        %v1150 = vadd.s32 %v1054, 4294967184
        %v1151 = vlaneseq
        %v1152 = vshrl.u32 %v1151, 7
        %v1153 = vsub.s32 %v1150, %v1152
        %v1154 = vrot.slane %v1035, %v1153
        %vm1155 = vcmask 982912
        %v1156 = vsel %vm1155, %v1154, %v1149
        %v1157 = vadd.s32 %v1054, 4294967176
        %v1158 = vlaneseq
        %v1159 = vshrl.u32 %v1158, 7
        %v1160 = vsub.s32 %v1157, %v1159
        %v1161 = vrot.slane %v1036, %v1160
        %vm1162 = vcmask 1048512
        %v1163 = vsel %vm1162, %v1161, %v1156
        %1165 = vst [vmem:[%s342] sm:$0x1] %v1163
        %s1166 = sand.u32 %s231, 1
        %s1167 = scalar_lea.sflag [#allocation4], %s1166
        %s1168 = sand.u32 %s231, 1
        %s1169 = scalar_lea.vmem [#allocation3], %s1168
        // Predicated region
        $region57: #{reward_model_forward.1} parent=55 // pred_check
          %p1170 = pneg %p241
        $region58: #{reward_model_forward.1} parent=55 // pred_check_branch
          %1172 = sbr.rel (%p1170) target = $region60
        $region59: #{reward_model_forward.1} parent=55 // pred_region
          %s1174 = ssub.s32 16, 16
          %1175 = vsyncadd %s1167, %s1174
          %s1176 = smul.addr %s24, 16
          %s1177 = scalar_lea.hbm %s9, %s1176
          %s1179 = sshll.u32 %s1169, 4
          %s1180 = int_to_ptr.vmem [resolvable:$true] %s1179
          %1182 = dma.vmem_to_hbm [thread:$0]  %s1180, 16, %s1177, %s1167
        $region60: #{reward_model_forward.1} parent=55 // pred_fallthru
          _
      $region56: #{reward_model_forward.1} parent=5 // pred_fallthru
        _
      %p1183 = scmp.le.s32.totalorder 2, %s19
      // Predicated region
      $region61: #{reward_model_forward.1} parent=5 // pred_check
        %p1184 = pneg %p1183
      $region62: #{reward_model_forward.1} parent=5 // pred_check_branch
        %1186 = sbr.rel (%p1184) target = $region64
      $region63: #{reward_model_forward.1} parent=5 // pred_region
        %s1187 = ssub.s32 %s19, 2
        // Predicated region
        $region65: #{reward_model_forward.1} parent=63 // pred_check
          %p1188 = pneg %p247
        $region66: #{reward_model_forward.1} parent=63 // pred_check_branch
          %1190 = sbr.rel (%p1188) target = $region68
        $region67: #{reward_model_forward.1} parent=63 // pred_region
          %s1191 = sand.u32 %s232, 1
          %s1192 = scalar_lea.sflag [#allocation4], %s1191
          %s1193 = sand.u32 %s232, 1
          %s1194 = scalar_lea.vmem [#allocation3], %s1193
          %1195 = dma.done %s1192, 16
        $region68: #{reward_model_forward.1} parent=63 // pred_fallthru
          _
      $region64: #{reward_model_forward.1} parent=5 // pred_fallthru
        _
    $region6: #{reward_model_forward.1} parent=1 // loop_footer
      %s23 = sadd.s32 1, %s19
    $region7: #{reward_model_forward.1} parent=1 // loop_footer_branch
      %18 = sbr.rel target = $region3
    $region8: #{reward_model_forward.1} parent=1 // loop_exit
      _
    %1196 = vsyncpa [#allocation4], 1
    %s1197 = scalar_lea.sflag [#allocation4], 1
    %1198 = vsyncpa %s1197, 1

</llo_original>
